<compile_context>
chip_gen: v5e
topology: v5e:2x2
jax: 0.10.0
libtpu: 0.0.40
codegen_flags: <defaults>
</compile_context>

<pallas_src>
import functools

import jax
import jax.numpy as jnp
from jax import lax
from jax.experimental import pallas as pl
from jax.experimental.pallas import tpu as pltpu

LANES = 128
SUBLANES = 8
ROW_ALIGN = 16                 # tile_r rounded to 16 rows (covers f32 and bf16 tiling)
MAX_TILE_R = 8192              # 8192 x 128 f32 block = 4 MiB per stream per buffer
NUM_ACC = 8                    # independent (8,128) accumulators in the in-tile reduce
VMEM_LIMIT_BYTES = 48 * 1024 * 1024   # > 2 streams x 2 buffers x 4 MiB, < v7x 64 MiB


def _bce_partial_sum_kernel(x_ref, t_ref, out_ref, *, n_valid, tile_r, num_acc):
    """One grid step: numerically stable BCE-with-logits on a (tile_r, 128)
    block, reduced to an (8, 128) partial sum written to this step's own
    output block."""
    pid = pl.program_id(0)

    # In-kernel upcast (VPU work hidden under DMA) instead of a wrapper-side
    # astype that would double HBM bytes for narrow dtypes.
    x = x_ref[...].astype(jnp.float32)
    t = t_ref[...].astype(jnp.float32)

    # Numerically stable BCE with logits:
    #   loss = max(x, 0) - x*t + log(1 + exp(-|x|))
    # TODO(synk): on v7x, if a profile shows the single EUP slot (2
    # transcendentals/elem) capping the kernel below the HBM roofline, replace
    # log1p(exp(-|x|)) with a VALU polynomial softplus approximation.
    loss = jnp.maximum(x, 0.0) - x * t + jnp.log1p(jnp.exp(-jnp.abs(x)))

    def _reduce(vals):
        # (tile_r, 128) -> num_acc independent (8,128) accumulators (short,
        # interleavable VALU add chains, hidden under the block DMA), then a
        # tiny fold of the accumulators.  Final cross-lane/sublane reduce is
        # deferred to the wrapper-side jnp.sum.
        r8 = tile_r // SUBLANES
        acc = num_acc
        while acc > 1 and r8 % acc:
            acc //= 2
        part = vals.reshape(r8 // acc, acc * SUBLANES, LANES).sum(axis=0)  # (acc*8, 128)
        return part.reshape(acc, SUBLANES, LANES).sum(axis=0)              # (8, 128)

    is_last = pid == pl.num_programs(0) - 1

    # All non-last tiles are fully valid (padding / ragged tail can only land
    # in the last tile), so they skip the mask entirely.
    @pl.when(jnp.logical_not(is_last))
    def _():
        out_ref[...] = _reduce(loss)

    @pl.when(is_last)
    def _():
        # Two-level (row, lane) compare: no int32 overflow for n_valid >= 2^31.
        row = lax.broadcasted_iota(jnp.int32, (tile_r, LANES), 0)
        lane = lax.broadcasted_iota(jnp.int32, (tile_r, LANES), 1)
        grow = pid * tile_r + row
        n_full_rows = n_valid // LANES       # static Python ints
        n_rem = n_valid % LANES
        valid = (grow < n_full_rows) | ((grow == n_full_rows) & (lane < n_rem))
        # jnp.where (select), NOT loss*mask: garbage in the out-of-bounds tail
        # of a ragged/padded last block may be Inf/NaN and must not poison it.
        out_ref[...] = _reduce(jnp.where(valid, loss, 0.0))


def bce_with_logits_loss(logits, targets, reduction="mean"):
    """Pallas TPU equivalent of the PyTorch BCELoss module above
    (which actually computes BCE *with logits* on flattened float inputs)."""
    x = jnp.ravel(logits)       # bitcast reshape; keep original dtype, cast in-kernel
    t = jnp.ravel(targets)
    n = x.shape[0]
    if n == 0:
        raise ValueError("empty input")

    if n % LANES:
        # TODO(synk): a flat 1-D input path would make non-multiple-of-128
        # sizes zero-copy as well; aligned sizes below already avoid any copy.
        pad = LANES - n % LANES
        x = jnp.pad(x, (0, pad))
        t = jnp.pad(t, (0, pad))

    rows = x.shape[0] // LANES
    x2 = x.reshape(rows, LANES)     # zero-copy view when n % 128 == 0
    t2 = t.reshape(rows, LANES)

    # Tile rows: as big as allowed; ragged last grid block handled in-kernel.
    tile_r = min(MAX_TILE_R, ((rows + ROW_ALIGN - 1) // ROW_ALIGN) * ROW_ALIGN)
    num_tiles = pl.cdiv(rows, tile_r)

    kernel = functools.partial(_bce_partial_sum_kernel,
                               n_valid=n, tile_r=tile_r, num_acc=NUM_ACC)

    bytes_accessed = (x2.size * x2.dtype.itemsize
                      + t2.size * t2.dtype.itemsize
                      + num_tiles * SUBLANES * LANES * 4)
    cost = pl.CostEstimate(flops=6 * n, transcendentals=2 * n,
                           bytes_accessed=bytes_accessed)

    partials = pl.pallas_call(
        kernel,
        out_shape=jax.ShapeDtypeStruct((num_tiles * SUBLANES, LANES), jnp.float32),
        grid_spec=pltpu.PrefetchScalarGridSpec(
            num_scalar_prefetch=0,
            grid=(num_tiles,),
            in_specs=[
                pl.BlockSpec((tile_r, LANES), lambda i: (i, 0)),
                pl.BlockSpec((tile_r, LANES), lambda i: (i, 0)),
            ],
            out_specs=pl.BlockSpec((SUBLANES, LANES), lambda i: (i, 0)),
        ),
        compiler_params=pltpu.CompilerParams(
            # Independent per-tile partial sums -> grid axis is parallel.
            # TODO(synk): on v7x, verify in a bundle dump that this shards the
            # tile loop across both TensorCores; if not, add an explicit
            # core-split leading grid axis with pltpu.CORE_PARALLEL.
            dimension_semantics=("parallel",),
            vmem_limit_bytes=VMEM_LIMIT_BYTES,
        ),
        cost_estimate=cost,
    )(x2, t2)

    total = jnp.sum(partials)   # tiny (num_tiles*8, 128) reduce outside the kernel

    if reduction == "mean":
        return total / jnp.float32(n)
    elif reduction == "sum":
        return total
    else:
        # TODO(synk): reduction='none' would need a per-element loss output path.
        raise ValueError(f"unsupported reduction: {reduction}")


def _ref_loss(x, t, reduction="mean"):
    xf = x.reshape(-1).astype(jnp.float32)
    tf = t.reshape(-1).astype(jnp.float32)
    l = jnp.maximum(xf, 0.0) - xf * tf + jnp.log1p(jnp.exp(-jnp.abs(xf)))
    return jnp.mean(l) if reduction == "mean" else jnp.sum(l)


if __name__ == "__main__":
    key = jax.random.PRNGKey(0)
    k1, k2, k3, k4, k5, k6, k7, k8 = jax.random.split(key, 8)

    # 1) NCHW-like input, 128-aligned size (zero-copy path, full tile).
    x = jax.random.normal(k1, (2, 4, 16, 16), dtype=jnp.float32)
    target = (jax.random.uniform(k2, (2, 4, 16, 16)) > 0.5).astype(jnp.float32)
    loss = jax.block_until_ready(bce_with_logits_loss(x, target, reduction="mean"))
    assert jnp.allclose(loss, _ref_loss(x, target), rtol=1e-5, atol=1e-6), loss

    # 2) Non-128-aligned size (pad path + lane-partial last-row mask).
    x_odd = jax.random.normal(k3, (3, 5, 7), dtype=jnp.float32)
    t_odd = (jax.random.uniform(k4, (3, 5, 7)) > 0.5).astype(jnp.float32)
    loss_odd = jax.block_until_ready(bce_with_logits_loss(x_odd, t_odd))
    assert jnp.allclose(loss_odd, _ref_loss(x_odd, t_odd), rtol=1e-5, atol=1e-6), loss_odd

    # 3) 128-aligned but ragged in the sublane/tile dim (rows=15 < tile_r=16).
    x_rag = jax.random.normal(k5, (5, 3, 128), dtype=jnp.float32)
    t_rag = (jax.random.uniform(k6, (5, 3, 128)) > 0.5).astype(jnp.float32)
    loss_rag = jax.block_until_ready(bce_with_logits_loss(x_rag, t_rag, reduction="sum"))
    assert jnp.allclose(loss_rag, _ref_loss(x_rag, t_rag, "sum"), rtol=1e-5, atol=1e-4), loss_rag

    # 4) bf16 targets (exact 0/1, halves that HBM stream; upcast in-kernel).
    x_b = jax.random.normal(k7, (2, 8, 128), dtype=jnp.float32)
    t_b = (jax.random.uniform(k8, (2, 8, 128)) > 0.5).astype(jnp.bfloat16)
    loss_b = jax.block_until_ready(bce_with_logits_loss(x_b, t_b))
    assert jnp.allclose(loss_b, _ref_loss(x_b, t_b), rtol=1e-5, atol=1e-6), loss_b

    print("KERNEL_OK")
</pallas_src>

<mosaic_0001>
module attributes {stable_mosaic.version = 11 : i64} {
  func.func @_bce_partial_sum_kernel(%arg0: i32, %arg1: memref<16x128xf32, #tpu.memory_space<vmem>>, %arg2: memref<16x128xf32, #tpu.memory_space<vmem>>, %arg3: memref<8x128xf32, #tpu.memory_space<vmem>>) attributes {dimension_semantics = [#tpu.dimension_semantics<parallel>], iteration_bounds = array<i64: 1>, scalar_prefetch = 0 : i64, scratch_operands = 0 : i64, tpu.core_type = #tpu.core_type<tc>, window_params = [{transform_indices = @transform_0, window_bounds = array<i64: 16, 128>}, {transform_indices = @transform_1, window_bounds = array<i64: 16, 128>}, {transform_indices = @transform_2, window_bounds = array<i64: 8, 128>}]} {
    %c0 = arith.constant 0 : index
    %c0_0 = arith.constant 0 : index
    %0 = vector.load %arg1[%c0, %c0_0] : memref<16x128xf32, #tpu.memory_space<vmem>>, vector<16x128xf32>
    %c0_1 = arith.constant 0 : index
    %c0_2 = arith.constant 0 : index
    %1 = vector.load %arg2[%c0_1, %c0_2] : memref<16x128xf32, #tpu.memory_space<vmem>>, vector<16x128xf32>
    %cst = arith.constant 0.000000e+00 : f32
    %2 = vector.broadcast %cst : f32 to vector<16x128xf32>
    %3 = arith.maximumf %0, %2 : vector<16x128xf32>
    %4 = arith.mulf %0, %1 : vector<16x128xf32>
    %5 = arith.subf %3, %4 : vector<16x128xf32>
    %6 = math.absf %0 : vector<16x128xf32>
    %cst_3 = arith.constant 0.000000e+00 : f32
    %7 = vector.broadcast %cst_3 : f32 to vector<16x128xf32>
    %8 = arith.subf %7, %6 : vector<16x128xf32>
    %9 = math.exp %8 : vector<16x128xf32>
    %10 = math.log1p %9 : vector<16x128xf32>
    %11 = arith.addf %5, %10 : vector<16x128xf32>
    %c0_i32 = arith.constant 0 : i32
    %12 = arith.cmpi eq, %arg0, %c0_i32 : i32
    %true = arith.constant true
    %13 = arith.xori %12, %true : i1
    %14 = arith.extui %13 : i1 to i32
    %c0_i32_4 = arith.constant 0 : i32
    %15 = arith.cmpi ne, %14, %c0_i32_4 : i32
    scf.if %15 {
      %18 = vector.shape_cast %11 : vector<16x128xf32> to vector<1x16x128xf32>
      %cst_6 = arith.constant dense<0.000000e+00> : vector<16x128xf32>
      %19 = vector.multi_reduction <add>, %18, %cst_6 [0] : vector<1x16x128xf32> to vector<16x128xf32>
      %20 = vector.shape_cast %19 : vector<16x128xf32> to vector<2x8x128xf32>
      %cst_7 = arith.constant dense<0.000000e+00> : vector<8x128xf32>
      %21 = vector.multi_reduction <add>, %20, %cst_7 [0] : vector<2x8x128xf32> to vector<8x128xf32>
      %c0_8 = arith.constant 0 : index
      %c0_9 = arith.constant 0 : index
      %22 = vector.load %arg3[%c0_8, %c0_9] : memref<8x128xf32, #tpu.memory_space<vmem>>, vector<8x128xf32>
      tpu.vector_store %arg3[%c0_8, %c0_9], %21 {strides = array<i32>} : memref<8x128xf32, #tpu.memory_space<vmem>>, vector<8x128xf32>,
    } else {
    }
    %16 = arith.extui %12 : i1 to i32
    %c0_i32_5 = arith.constant 0 : i32
    %17 = arith.cmpi ne, %16, %c0_i32_5 : i32
    scf.if %17 {
      %18 = tpu.iota {dimensions = array<i32: 0>} : vector<16x128xi32>
      %19 = tpu.iota {dimensions = array<i32: 1>} : vector<16x128xi32>
      %c16_i32 = arith.constant 16 : i32
      %20 = arith.muli %arg0, %c16_i32 : i32
      %21 = vector.broadcast %20 : i32 to vector<16x128xi32>
      %22 = arith.addi %21, %18 : vector<16x128xi32>
      %c16_i32_6 = arith.constant 16 : i32
      %23 = vector.broadcast %c16_i32_6 : i32 to vector<16x128xi32>
      %24 = arith.cmpi slt, %22, %23 : vector<16x128xi32>
      %c16_i32_7 = arith.constant 16 : i32
      %25 = vector.broadcast %c16_i32_7 : i32 to vector<16x128xi32>
      %26 = arith.cmpi eq, %22, %25 : vector<16x128xi32>
      %c0_i32_8 = arith.constant 0 : i32
      %27 = vector.broadcast %c0_i32_8 : i32 to vector<16x128xi32>
      %28 = arith.cmpi slt, %19, %27 : vector<16x128xi32>
      %29 = arith.andi %26, %28 : vector<16x128xi1>
      %30 = arith.ori %24, %29 : vector<16x128xi1>
      %cst_9 = arith.constant 0.000000e+00 : f32
      %31 = vector.broadcast %cst_9 : f32 to vector<16x128xf32>
      %32 = arith.select %30, %11, %31 : vector<16x128xi1>, vector<16x128xf32>
      %33 = vector.shape_cast %32 : vector<16x128xf32> to vector<1x16x128xf32>
      %cst_10 = arith.constant dense<0.000000e+00> : vector<16x128xf32>
      %34 = vector.multi_reduction <add>, %33, %cst_10 [0] : vector<1x16x128xf32> to vector<16x128xf32>
      %35 = vector.shape_cast %34 : vector<16x128xf32> to vector<2x8x128xf32>
      %cst_11 = arith.constant dense<0.000000e+00> : vector<8x128xf32>
      %36 = vector.multi_reduction <add>, %35, %cst_11 [0] : vector<2x8x128xf32> to vector<8x128xf32>
      %c0_12 = arith.constant 0 : index
      %c0_13 = arith.constant 0 : index
      %37 = vector.load %arg3[%c0_12, %c0_13] : memref<8x128xf32, #tpu.memory_space<vmem>>, vector<8x128xf32>
      tpu.vector_store %arg3[%c0_12, %c0_13], %36 {strides = array<i32>} : memref<8x128xf32, #tpu.memory_space<vmem>>, vector<8x128xf32>,
    } else {
    }
    return
  }
  func.func @transform_0(%arg0: i32) -> (i32, i32) {
    %c0_i32 = arith.constant 0 : i32
    %c0_i32_0 = arith.constant 0 : i32
    return %arg0, %c0_i32 : i32, i32
  }
  func.func @transform_1(%arg0: i32) -> (i32, i32) {
    %c0_i32 = arith.constant 0 : i32
    %c0_i32_0 = arith.constant 0 : i32
    return %arg0, %c0_i32 : i32, i32
  }
  func.func @transform_2(%arg0: i32) -> (i32, i32) {
    %c0_i32 = arith.constant 0 : i32
    %c0_i32_0 = arith.constant 0 : i32
    return %arg0, %c0_i32 : i32, i32
  }
}

</mosaic_0001>

<llo_original>
// kernel: tpu_custom_call.1
$region0: #{tpu_custom_call.1}
  #allocation0 [shape = 'u32[]', space=smem, size = 0x4, offset = 0x4, fixed_abs, tag = 'smem constant byte address 0x4 - core index']
  #allocation1 [shape = 'u32[72,128]{1,0:T(1,128)}', space=vmem, size = 0x9000, scoped, tag = 'internal scratch']
  %s0 = inlined_call_operand.hbm [shape: f32[16,128], index: 0, kind: input, shape index: {}]
  %s1 = inlined_call_operand.hbm [shape: f32[16,128], index: 1, kind: input, shape index: {}]
  %s2 = inlined_call_operand.hbm [shape: f32[8,128], index: 2, kind: output, shape index: {}]
  %s3 = sld [smem:[#allocation0]]
  $region34: #{tpu_custom_call.1} parent=0
    _
  %s5 = ssub.s32 1, %s3
  %s6 = scalar_select 0, %s5, %s3
  $region1: #{tpu_custom_call.1} parent=0
    #allocation2 [shape = 'u8[8192]{0}', space=vmem, size = 0x2000, scoped, tag = 'input window, operand 0, single buffered']
    #allocation3 [shape = 's32[1]{0}', space=sflag, size = 0x4, scoped, tag = 'scoped memory for tpu_custom_call.1']
    #allocation4 [shape = 's32[1]{0}', space=sflag, size = 0x4, scoped, tag = 'scoped memory for tpu_custom_call.1']
    #allocation5 [shape = 'u8[8192]{0}', space=vmem, size = 0x2000, scoped, tag = 'input window, operand 1, single buffered']
    #allocation6 [shape = 's32[1]{0}', space=sflag, size = 0x4, scoped, tag = 'scoped memory for tpu_custom_call.1']
    #allocation7 [shape = 'u8[4096]{0}', space=vmem, size = 0x1000, scoped, tag = 'output window, operand 0, single buffered']
    %7 = vsyncpa [#allocation3], 0
    %8 = vsyncpa [#allocation6], 0
    %9 = vsyncpa [#allocation4], 0
    // Predicated region
    $region2: #{tpu_custom_call.1} parent=1 // pred_check
      _
    $region3: #{tpu_custom_call.1} parent=1 // pred_check_branch
      %11 = sbr.rel (0) target = $region5
    $region4: #{tpu_custom_call.1} parent=1 // pred_region
      %13 = vsyncadd [#allocation3], 0
      %s14 = sshll.u32 %s0, 4
      %s15 = int_to_ptr.hbm [resolvable:$true] %s14
      %s16 = sshll.u32 [#allocation2], 4
      %s17 = int_to_ptr.vmem [resolvable:$true] %s16
      %22 = dma.hbm_to_vmem [thread:$0]  %s15, 256, %s17, [#allocation3], 128, 128, 8
    $region5: #{tpu_custom_call.1} parent=1 // pred_fallthru
      _
    // Predicated region
    $region6: #{tpu_custom_call.1} parent=1 // pred_check
      _
    $region7: #{tpu_custom_call.1} parent=1 // pred_check_branch
      %24 = sbr.rel (0) target = $region9
    $region8: #{tpu_custom_call.1} parent=1 // pred_region
      %26 = vsyncadd [#allocation6], 0
      %s27 = sshll.u32 %s1, 4
      %s28 = int_to_ptr.hbm [resolvable:$true] %s27
      %s29 = sshll.u32 [#allocation5], 4
      %s30 = int_to_ptr.vmem [resolvable:$true] %s29
      %35 = dma.hbm_to_vmem [thread:$0]  %s28, 256, %s30, [#allocation6], 128, 128, 8
    $region9: #{tpu_custom_call.1} parent=1 // pred_fallthru
      _
    // Predicated region
    $region10: #{tpu_custom_call.1} parent=1 // pred_check
      _
    $region11: #{tpu_custom_call.1} parent=1 // pred_check_branch
      %37 = sbr.rel (0) target = $region13
    $region12: #{tpu_custom_call.1} parent=1 // pred_region
      %39 = dma.done [#allocation3], 256
    $region13: #{tpu_custom_call.1} parent=1 // pred_fallthru
      _
    // Predicated region
    $region14: #{tpu_custom_call.1} parent=1 // pred_check
      _
    $region15: #{tpu_custom_call.1} parent=1 // pred_check_branch
      %41 = sbr.rel (0) target = $region17
    $region16: #{tpu_custom_call.1} parent=1 // pred_region
      %43 = dma.done [#allocation6], 256
    $region17: #{tpu_custom_call.1} parent=1 // pred_fallthru
      _
    %v44 = vld [vmem:[#allocation2] sm:$0xff]
    %v45 = vld [vmem:[#allocation2 + $0x8] sm:$0xff]
    %v46 = vld [vmem:[#allocation5] sm:$0xff]
    %v47 = vld [vmem:[#allocation5 + $0x8] sm:$0xff]
    %v48 = vmax.f32 %v44, 0.0
    %v49 = vmax.f32 %v45, 0.0
    %v50 = vmul.f32 %v44, %v46
    %v51 = vmul.f32 %v45, %v47
    %v52 = vsub.f32 %v48, %v50
    %v53 = vsub.f32 %v49, %v51
    %v54 = vand.u32 2147483647, %v44
    %v55 = vand.u32 2147483647, %v45
    %v56 = vsub.f32 0.0, %v54
    %v57 = vsub.f32 0.0, %v55
    %v58 = vmul.f32 %v56, 1.442695
    %v59 = vpow.pop %v58
    %v60 = vmul.f32 %v57, 1.442695
    %v61 = vpow.pop %v60
    %v62 = vadd.f32 %v59, 1.0
    %v63 = vlog2.pop %v62
    %v64 = vmul.f32 %v63, 0.6931472
    %v65 = vmul.f32 -0.5, %v59
    %v66 = vadd.f32 %v65, 1.0
    %v67 = vmul.f32 %v66, %v59
    %v68 = vand.u32 2147483647, %v59
    %vm69 = vcmp.lt.f32.partialorder %v68, 0.0004427343
    %v70 = vsel %vm69, %v67, %v64
    %v71 = vadd.f32 %v61, 1.0
    %v72 = vlog2.pop %v71
    %v73 = vmul.f32 %v72, 0.6931472
    %v74 = vmul.f32 -0.5, %v61
    %v75 = vadd.f32 %v74, 1.0
    %v76 = vmul.f32 %v75, %v61
    %v77 = vand.u32 2147483647, %v61
    %vm78 = vcmp.lt.f32.partialorder %v77, 0.0004427343
    %v79 = vsel %vm78, %v76, %v73
    %v80 = vadd.f32 %v52, %v70
    %v81 = vadd.f32 %v53, %v79
    %p82 = scmp.eq.s32.totalorder 0, 0
    %p83 = scmp.ne.s32.totalorder 0, 0
    // Predicated region
    $region18: #{tpu_custom_call.1} parent=1 // pred_check
      %p84 = pneg %p83
    $region19: #{tpu_custom_call.1} parent=1 // pred_check_branch
      %86 = sbr.rel (%p84) target = $region21
    $region20: #{tpu_custom_call.1} parent=1 // pred_region
      %v87 = vadd.f32 %v80, 0.0
      %v88 = vadd.f32 %v81, 0.0
      %v89 = vadd.f32 %v87, %v88
      %90 = vst [vmem:[#allocation7] sm:$0xff] %v89
    $region21: #{tpu_custom_call.1} parent=1 // pred_fallthru
      _
    // Predicated region
    $region22: #{tpu_custom_call.1} parent=1 // pred_check
      %p91 = pneg %p82
    $region23: #{tpu_custom_call.1} parent=1 // pred_check_branch
      %93 = sbr.rel (%p91) target = $region25
    $region24: #{tpu_custom_call.1} parent=1 // pred_region
      %v94 = vlaneseq
      %v95 = vshrl.u32 %v94, 7
      %v96 = vadd.s32 %v95, 8
      %v97 = vlaneseq
      %v98 = vand.u32 %v97, 127
      %s99 = smul.u32 0, 16
      %v100 = vstv %s99
      %v101 = vadd.s32 %v100, %v95
      %v102 = vadd.s32 %v100, %v96
      %vm103 = vcmp.lt.s32.totalorder %v101, 16
      %vm104 = vcmp.lt.s32.totalorder %v102, 16
      %vm105 = vcmp.eq.s32.totalorder %v101, 16
      %vm106 = vcmp.eq.s32.totalorder %v102, 16
      %vm107 = vcmp.lt.s32.totalorder %v98, 0
      %vm108 = vmand %vm105, %vm107
      %vm109 = vmand %vm106, %vm107
      %vm110 = vmor %vm103, %vm108
      %vm111 = vmor %vm104, %vm109
      %v112 = vsel %vm110, %v80, 0.0
      %v113 = vsel %vm111, %v81, 0.0
      %v114 = vadd.f32 %v112, 0.0
      %v115 = vadd.f32 %v113, 0.0
      %v116 = vadd.f32 %v114, %v115
      %117 = vst [vmem:[#allocation7] sm:$0xff] %v116
    $region25: #{tpu_custom_call.1} parent=1 // pred_fallthru
      _
    // Predicated region
    $region26: #{tpu_custom_call.1} parent=1 // pred_check
      _
    $region27: #{tpu_custom_call.1} parent=1 // pred_check_branch
      %119 = sbr.rel (0) target = $region29
    $region28: #{tpu_custom_call.1} parent=1 // pred_region
      %121 = vsyncadd [#allocation4], 0
      %s123 = sshll.u32 [#allocation7], 4
      %s124 = int_to_ptr.vmem [resolvable:$true] %s123
      %s125 = sshll.u32 %s2, 4
      %s126 = int_to_ptr.hbm [resolvable:$true] %s125
      %128 = dma.vmem_to_hbm [thread:$0]  %s124, 128, %s126, [#allocation4]
    $region29: #{tpu_custom_call.1} parent=1 // pred_fallthru
      _
    // Predicated region
    $region30: #{tpu_custom_call.1} parent=1 // pred_check
      _
    $region31: #{tpu_custom_call.1} parent=1 // pred_check_branch
      %130 = sbr.rel (0) target = $region33
    $region32: #{tpu_custom_call.1} parent=1 // pred_region
      %132 = dma.done [#allocation4], 128
    $region33: #{tpu_custom_call.1} parent=1 // pred_fallthru
      _
    %133 = vsyncpa [#allocation3], 1
    %134 = vsyncpa [#allocation6], 1
    %135 = vsyncpa [#allocation4], 1

</llo_original>
